<compile_context>
chip_gen: v7x
topology: tpu7x:2x2x1
jax: 0.10.0
libtpu: 0.0.40
codegen_flags: <defaults>
</compile_context>

<pallas_src>
import functools

import jax
import jax.numpy as jnp
from jax.experimental import pallas as pl
from jax.experimental.pallas import tpu as pltpu

EPS = 1e-5  # torch nn.LayerNorm default


def _round_up(x, m):
    return ((x + m - 1) // m) * m


def _cdiv(a, b):
    return -(-a // b)


@functools.lru_cache(maxsize=1)
def _vmem_physical_bytes():
    """Physical VMEM per TensorCore; conservative 64 MiB (v7x) if unknown."""
    try:
        return int(pltpu.get_tpu_info().vmem_capacity_bytes)
    except Exception:
        return 64 * 1024 * 1024


def _make_resident_kernel(d_real, compute_dtype):
    """Single grid axis over row tiles; W stays VMEM-resident for the whole call."""
    inv_d = 1.0 / float(d_real)

    def kernel(x_ref, g_ref, b_ref, w_ref, wb_ref, o_ref):
        x = x_ref[...].astype(jnp.float32)
        mean = jnp.sum(x, axis=-1, keepdims=True) * inv_d
        centered = x - mean
        var = jnp.sum(centered * centered, axis=-1, keepdims=True) * inv_d
        xhat = centered * jax.lax.rsqrt(var + EPS)
        y = (xhat * g_ref[...].astype(jnp.float32)
             + b_ref[...].astype(jnp.float32)).astype(compute_dtype)
        out = jnp.dot(y, w_ref[...], preferred_element_type=jnp.float32)
        out = out + wb_ref[...].astype(jnp.float32)
        o_ref[...] = out.astype(o_ref.dtype)

    return kernel


def _make_slab_kernel(d_real, compute_dtype):
    """Two-axis grid (row tiles x W-column slabs) for large D.

    LayerNorm is computed once per row tile (on the first, innermost column
    slab) into a VMEM scratch and reused for every W column slab.  Correct
    because the column axis is the innermost 'arbitrary' axis and the x block
    index is invariant across it."""
    inv_d = 1.0 / float(d_real)

    def kernel(x_ref, g_ref, b_ref, w_ref, wb_ref, o_ref, y_ref):
        @pl.when(pl.program_id(1) == 0)
        def _():
            x = x_ref[...].astype(jnp.float32)
            mean = jnp.sum(x, axis=-1, keepdims=True) * inv_d
            centered = x - mean
            var = jnp.sum(centered * centered, axis=-1, keepdims=True) * inv_d
            xhat = centered * jax.lax.rsqrt(var + EPS)
            y_ref[...] = (xhat * g_ref[...].astype(jnp.float32)
                          + b_ref[...].astype(jnp.float32)).astype(y_ref.dtype)

        out = jnp.dot(y_ref[...], w_ref[...], preferred_element_type=jnp.float32)
        out = out + wb_ref[...].astype(jnp.float32)
        o_ref[...] = out.astype(o_ref.dtype)

    return kernel


def _pick_row_tiling(rows, target):
    """Balanced row tiles (no padding), >=2 tiles when possible (v7x megacore)."""
    if rows <= 8:
        return rows, 1                      # full-extent block, single tile
    n_tiles = max(2, _cdiv(rows, target))
    row_tile = _round_up(_cdiv(rows, n_tiles), 8)
    return row_tile, _cdiv(rows, row_tile)


@functools.partial(jax.jit, static_argnames=("force_slab",))
def prenorm(x, gamma, beta, w, wb, *, force_slab=False):
    """PreNorm with fn = Linear(dim, dim): out = LayerNorm(x) @ W + b.

    x: (B, N, D); gamma/beta/wb: (D,); w: (D_in, D_out) = (D, D)."""
    B, N, D = x.shape
    rows = B * N

    # Free reshapes (no HBM copies): flatten rows, make params 2-D.
    x2 = x.reshape(rows, D)
    g2 = gamma.reshape(1, D)
    b2 = beta.reshape(1, D)
    wb2 = wb.reshape(1, D)

    xb = x.dtype.itemsize
    wbyt = w.dtype.itemsize
    compute_dtype = x.dtype  # native dtype on the MXU (bf16 fast path for bf16
                             # models); keeps reference numerics for f32 models.
    # TODO(synk): optional bf16 cast of y/W for f32 models (3-4x MXU, halves W
    # traffic) -- left off to preserve the module's forward-pass numerics.

    phys = _vmem_physical_bytes()
    budget = min(int(phys * 0.8), 110 * 1024 * 1024)   # ~51 MiB on v7x, ~102 MiB v5e/v6e
    slack = 4 * 1024 * 1024
    params_bytes = 2 * 3 * D * 4

    w_resident_bytes = 2 * D * D * wbyt     # Pallas double-buffers inputs
    use_resident = (not force_slab) and (
        w_resident_bytes + 4 * 8 * D * xb + params_bytes + slack <= budget)

    if use_resident:
        # ---------- W-resident path (common case) ----------
        row_tile, n_row = _pick_row_tiling(rows, 256)

        def est(rt):
            # x in + out (each double-buffered) + resident W + params + slack
            return 4 * rt * D * xb + w_resident_bytes + params_bytes + slack

        while est(row_tile) > budget and row_tile > 8:
            row_tile = max(8, _round_up(row_tile // 2, 8))
            n_row = _cdiv(rows, row_tile)

        vmem_limit = int(min(budget, max(est(row_tile), 32 * 1024 * 1024)))

        out = pl.pallas_call(
            _make_resident_kernel(D, compute_dtype),
            out_shape=jax.ShapeDtypeStruct((rows, D), x.dtype),
            grid_spec=pltpu.PrefetchScalarGridSpec(
                num_scalar_prefetch=0,
                grid=(n_row,),
                in_specs=[
                    pl.BlockSpec((row_tile, D), lambda i: (i, 0)),   # x rows
                    pl.BlockSpec((1, D), lambda i: (0, 0)),          # gamma
                    pl.BlockSpec((1, D), lambda i: (0, 0)),          # beta
                    pl.BlockSpec((D, D), lambda i: (0, 0)),          # W (resident)
                    pl.BlockSpec((1, D), lambda i: (0, 0)),          # linear bias
                ],
                out_specs=pl.BlockSpec((row_tile, D), lambda i: (i, 0)),
            ),
            compiler_params=pltpu.CompilerParams(
                dimension_semantics=("parallel",),
                vmem_limit_bytes=vmem_limit,
            ),
        )(x2, g2, b2, w, wb2)
    else:
        # ---------- W-column-slab fallback path (very large D) ----------
        n_tile = D if D <= 512 else 512      # >=256-wide slabs; ragged last slab via cdiv
        large_vmem = phys >= 96 * 1024 * 1024            # v5e / v6e
        if large_vmem:
            target = 1024 if xb <= 2 else 512
        else:                                            # v7x-class VMEM budget
            target = 512 if xb <= 2 else 384
        row_tile, n_row = _pick_row_tiling(rows, target)

        def est(rt):
            return (2 * rt * D * xb                       # x (double-buffered)
                    + rt * D * compute_dtype.itemsize     # y scratch
                    + 2 * rt * n_tile * xb                # out (double-buffered)
                    + 2 * D * n_tile * wbyt               # W slab (double-buffered)
                    + params_bytes + slack)

        while est(row_tile) > budget and row_tile > 64:
            row_tile = max(64, _round_up(row_tile // 2, 8))
            n_row = _cdiv(rows, row_tile)
        n_col = _cdiv(D, n_tile)
        vmem_limit = int(min(budget, max(est(row_tile), 32 * 1024 * 1024)))

        out = pl.pallas_call(
            _make_slab_kernel(D, compute_dtype),
            out_shape=jax.ShapeDtypeStruct((rows, D), x.dtype),
            grid_spec=pltpu.PrefetchScalarGridSpec(
                num_scalar_prefetch=0,
                grid=(n_row, n_col),
                in_specs=[
                    # x block index invariant across j -> fetched once per row tile
                    pl.BlockSpec((row_tile, D), lambda i, j: (i, 0)),
                    pl.BlockSpec((1, D), lambda i, j: (0, 0)),        # gamma
                    pl.BlockSpec((1, D), lambda i, j: (0, 0)),        # beta
                    pl.BlockSpec((D, n_tile), lambda i, j: (0, j)),   # W slab
                    pl.BlockSpec((1, n_tile), lambda i, j: (0, j)),   # linear bias
                ],
                out_specs=pl.BlockSpec((row_tile, n_tile), lambda i, j: (i, j)),
                scratch_shapes=[pltpu.VMEM((row_tile, D), compute_dtype)],
            ),
            compiler_params=pltpu.CompilerParams(
                dimension_semantics=("parallel", "arbitrary"),
                vmem_limit_bytes=vmem_limit,
            ),
        )(x2, g2, b2, w, wb2)

    return out.reshape(B, N, D)


def prenorm_ref(x, gamma, beta, w, wb):
    x32 = x.astype(jnp.float32)
    mean = jnp.mean(x32, axis=-1, keepdims=True)
    var = jnp.mean((x32 - mean) ** 2, axis=-1, keepdims=True)
    xhat = (x32 - mean) * jax.lax.rsqrt(var + EPS)
    y = xhat * gamma.astype(jnp.float32) + beta.astype(jnp.float32)
    out = jnp.dot(y, w.astype(jnp.float32),
                  precision=jax.lax.Precision.HIGHEST) + wb.astype(jnp.float32)
    return out.astype(x.dtype)


if __name__ == "__main__":
    key = jax.random.PRNGKey(0)

    def make_inputs(k, B, N, D, dtype=jnp.float32):
        kx, kw, kwb = jax.random.split(k, 3)
        x = jax.random.normal(kx, (B, N, D), dtype=dtype)
        gamma = jnp.ones((D,), dtype=dtype)   # torch LayerNorm default init
        beta = jnp.zeros((D,), dtype=dtype)
        w = (jax.random.normal(kw, (D, D)) * 0.02).astype(dtype)
        wb = (jax.random.normal(kwb, (D,)) * 0.02).astype(dtype)
        return x, gamma, beta, w, wb

    k1, k2, k3 = jax.random.split(key, 3)

    # 1) Module demo shape: batch=2, seq=8, dim=32 (W-resident path, 2 row tiles).
    args = make_inputs(k1, 2, 8, 32)
    out = jax.block_until_ready(prenorm(*args))
    ref = prenorm_ref(*args)
    assert out.shape == (2, 8, 32)
    assert jnp.allclose(out, ref, atol=5e-4, rtol=5e-4), "mismatch (small)"

    # 2) Balanced row tiles + partial (masked) last row block, no padding copies.
    args2 = make_inputs(k2, 3, 100, 256)
    out2 = jax.block_until_ready(prenorm(*args2))
    ref2 = prenorm_ref(*args2)
    assert out2.shape == (3, 100, 256)
    assert jnp.allclose(out2, ref2, atol=5e-4, rtol=5e-4), "mismatch (rows)"

    # 3) Two-axis fallback path (row tiles x W column slabs, ragged last slab)
    #    with the LayerNorm-reuse VMEM scratch.
    args3 = make_inputs(k3, 2, 80, 640)
    out3 = jax.block_until_ready(prenorm(*args3, force_slab=True))
    ref3 = prenorm_ref(*args3)
    assert out3.shape == (2, 80, 640)
    assert jnp.allclose(out3, ref3, atol=5e-4, rtol=5e-4), "mismatch (slab)"

    print("KERNEL_OK")
</pallas_src>

<mosaic_0001>
module attributes {stable_mosaic.version = 11 : i64} {
  func.func @kernel(%arg0: i32, %arg1: memref<8x32xf32, #tpu.memory_space<vmem>>, %arg2: memref<1x32xf32, #tpu.memory_space<vmem>>, %arg3: memref<1x32xf32, #tpu.memory_space<vmem>>, %arg4: memref<32x32xf32, #tpu.memory_space<vmem>>, %arg5: memref<1x32xf32, #tpu.memory_space<vmem>>, %arg6: memref<8x32xf32, #tpu.memory_space<vmem>>) attributes {dimension_semantics = [#tpu.dimension_semantics<parallel>], iteration_bounds = array<i64: 2>, scalar_prefetch = 0 : i64, scratch_operands = 0 : i64, tpu.core_type = #tpu.core_type<tc>, window_params = [{transform_indices = @transform_0, window_bounds = array<i64: 8, 32>}, {pipeline_mode = #tpu.pipeline_mode<synchronous>, transform_indices = @transform_1, window_bounds = array<i64: 1, 32>}, {pipeline_mode = #tpu.pipeline_mode<synchronous>, transform_indices = @transform_2, window_bounds = array<i64: 1, 32>}, {pipeline_mode = #tpu.pipeline_mode<synchronous>, transform_indices = @transform_3, window_bounds = array<i64: 32, 32>}, {pipeline_mode = #tpu.pipeline_mode<synchronous>, transform_indices = @transform_4, window_bounds = array<i64: 1, 32>}, {transform_indices = @transform_5, window_bounds = array<i64: 8, 32>}]} {
    %c0 = arith.constant 0 : index
    %c0_0 = arith.constant 0 : index
    %0 = vector.load %arg1[%c0, %c0_0] : memref<8x32xf32, #tpu.memory_space<vmem>>, vector<8x32xf32>
    %cst = arith.constant dense<0.000000e+00> : vector<8xf32>
    %1 = vector.multi_reduction <add>, %0, %cst [1] : vector<8x32xf32> to vector<8xf32>
    %2 = vector.shape_cast %1 : vector<8xf32> to vector<8x1xf32>
    %cst_1 = arith.constant 3.125000e-02 : f32
    %3 = vector.broadcast %cst_1 : f32 to vector<8x1xf32>
    %4 = arith.mulf %2, %3 : vector<8x1xf32>
    %5 = vector.broadcast %4 : vector<8x1xf32> to vector<8x32xf32>
    %6 = arith.subf %0, %5 : vector<8x32xf32>
    %7 = arith.mulf %6, %6 : vector<8x32xf32>
    %cst_2 = arith.constant dense<0.000000e+00> : vector<8xf32>
    %8 = vector.multi_reduction <add>, %7, %cst_2 [1] : vector<8x32xf32> to vector<8xf32>
    %9 = vector.shape_cast %8 : vector<8xf32> to vector<8x1xf32>
    %cst_3 = arith.constant 3.125000e-02 : f32
    %10 = vector.broadcast %cst_3 : f32 to vector<8x1xf32>
    %11 = arith.mulf %9, %10 : vector<8x1xf32>
    %cst_4 = arith.constant 9.99999974E-6 : f32
    %12 = vector.broadcast %cst_4 : f32 to vector<8x1xf32>
    %13 = arith.addf %11, %12 : vector<8x1xf32>
    %14 = math.rsqrt %13 : vector<8x1xf32>
    %15 = vector.broadcast %14 : vector<8x1xf32> to vector<8x32xf32>
    %16 = arith.mulf %6, %15 : vector<8x32xf32>
    %c0_5 = arith.constant 0 : index
    %c0_6 = arith.constant 0 : index
    %17 = vector.load %arg2[%c0_5, %c0_6] : memref<1x32xf32, #tpu.memory_space<vmem>>, vector<1x32xf32>
    %18 = vector.broadcast %17 : vector<1x32xf32> to vector<8x32xf32>
    %19 = arith.mulf %16, %18 : vector<8x32xf32>
    %c0_7 = arith.constant 0 : index
    %c0_8 = arith.constant 0 : index
    %20 = vector.load %arg3[%c0_7, %c0_8] : memref<1x32xf32, #tpu.memory_space<vmem>>, vector<1x32xf32>
    %21 = vector.broadcast %20 : vector<1x32xf32> to vector<8x32xf32>
    %22 = arith.addf %19, %21 : vector<8x32xf32>
    %c0_9 = arith.constant 0 : index
    %c0_10 = arith.constant 0 : index
    %23 = vector.load %arg4[%c0_9, %c0_10] : memref<32x32xf32, #tpu.memory_space<vmem>>, vector<32x32xf32>
    %cst_11 = arith.constant dense<0.000000e+00> : vector<8x32xf32>
    %24 = tpu.matmul %22, %23, %cst_11 {dimension_numbers = #tpu.dot_dimension_numbers<[1], [0], [0], [1], [0, 0, 1, 1], [], []>} : vector<8x32xf32>, vector<32x32xf32>, vector<8x32xf32> -> vector<8x32xf32>
    %c0_12 = arith.constant 0 : index
    %c0_13 = arith.constant 0 : index
    %25 = vector.load %arg5[%c0_12, %c0_13] : memref<1x32xf32, #tpu.memory_space<vmem>>, vector<1x32xf32>
    %26 = vector.broadcast %25 : vector<1x32xf32> to vector<8x32xf32>
    %27 = arith.addf %24, %26 : vector<8x32xf32>
    %c0_14 = arith.constant 0 : index
    %c0_15 = arith.constant 0 : index
    %28 = vector.load %arg6[%c0_14, %c0_15] : memref<8x32xf32, #tpu.memory_space<vmem>>, vector<8x32xf32>
    tpu.vector_store %arg6[%c0_14, %c0_15], %27 {strides = array<i32>} : memref<8x32xf32, #tpu.memory_space<vmem>>, vector<8x32xf32>,
    return
  }
  func.func @transform_0(%arg0: i32) -> (i32, i32) {
    %c0_i32 = arith.constant 0 : i32
    %c0_i32_0 = arith.constant 0 : i32
    return %arg0, %c0_i32 : i32, i32
  }
  func.func @transform_1(%arg0: i32) -> (i32, i32) {
    %c0_i32 = arith.constant 0 : i32
    %c0_i32_0 = arith.constant 0 : i32
    %c0_i32_1 = arith.constant 0 : i32
    return %c0_i32, %c0_i32_0 : i32, i32
  }
  func.func @transform_2(%arg0: i32) -> (i32, i32) {
    %c0_i32 = arith.constant 0 : i32
    %c0_i32_0 = arith.constant 0 : i32
    %c0_i32_1 = arith.constant 0 : i32
    return %c0_i32, %c0_i32_0 : i32, i32
  }
  func.func @transform_3(%arg0: i32) -> (i32, i32) {
    %c0_i32 = arith.constant 0 : i32
    %c0_i32_0 = arith.constant 0 : i32
    %c0_i32_1 = arith.constant 0 : i32
    return %c0_i32, %c0_i32_0 : i32, i32
  }
  func.func @transform_4(%arg0: i32) -> (i32, i32) {
    %c0_i32 = arith.constant 0 : i32
    %c0_i32_0 = arith.constant 0 : i32
    %c0_i32_1 = arith.constant 0 : i32
    return %c0_i32, %c0_i32_0 : i32, i32
  }
  func.func @transform_5(%arg0: i32) -> (i32, i32) {
    %c0_i32 = arith.constant 0 : i32
    %c0_i32_0 = arith.constant 0 : i32
    return %arg0, %c0_i32 : i32, i32
  }
}

</mosaic_0001>

<llo_original>
// kernel: prenorm.1
$region0: #{prenorm.1}
  #allocation0 [shape = 'u32[]', space=smem, size = 0x4, offset = 0x4, fixed_abs, tag = 'smem constant byte address 0x4 - core index']
  #allocation1 [shape = 'u32[144,128]{1,0:T(1,128)}', space=vmem, size = 0x12000, scoped, tag = 'internal scratch']
  %s0 = inlined_call_operand.hbm [shape: f32[16,32], index: 0, kind: input, shape index: {}]
  %s1 = inlined_call_operand.vmem [shape: f32[1,32], index: 1, kind: input, shape index: {}]
  %s2 = inlined_call_operand.vmem [shape: f32[1,32], index: 2, kind: input, shape index: {}]
  %s3 = inlined_call_operand.hbm [shape: f32[32,32], index: 3, kind: input, shape index: {}]
  %s4 = inlined_call_operand.vmem [shape: f32[1,32], index: 4, kind: input, shape index: {}]
  %s5 = inlined_call_operand.hbm [shape: f32[16,32], index: 5, kind: output, shape index: {}]
  %s6 = sld [smem:[#allocation0]]
  $region61: #{prenorm.1} parent=0
    _
  %s8 = ssub.s32 1, %s6
  %s9 = scalar_select 0, %s8, %s6
  $region1: #{prenorm.1} parent=0
    #allocation2 [shape = 'u8[8192]{0}', space=vmem, size = 0x2000, scoped, tag = 'input window, operand 0']
    #allocation3 [shape = 's32[2]{0}', space=sflag, size = 0x8, scoped, tag = 'scoped memory for prenorm.1']
    #allocation4 [shape = 's32[2]{0}', space=sflag, size = 0x8, scoped, tag = 'scoped memory for prenorm.1']
    #allocation5 [shape = 'u8[16384]{0}', space=vmem, size = 0x4000, scoped, tag = 'input window, operand 3, single buffered']
    #allocation6 [shape = 's32[1]{0}', space=sflag, size = 0x4, scoped, tag = 'scoped memory for prenorm.1']
    #allocation7 [shape = 'u8[8192]{0}', space=vmem, size = 0x2000, scoped, tag = 'output window, operand 0']
    %10 = vsyncpa [#allocation3], 0
    %s11 = scalar_lea.sflag [#allocation3], 1
    %12 = vsyncpa %s11, 0
    %13 = vsyncpa [#allocation6], 0
    %14 = vsyncpa [#allocation4], 0
    %s15 = scalar_lea.sflag [#allocation4], 1
    %16 = vsyncpa %s15, 0
    loop: start=0, step=1, limit=4
    $region2: #{prenorm.1} parent=1 // loop_pre_header
      _
    $region3: #{prenorm.1} parent=1 // loop_header
      %s18 = sphi 0, %s22
      %p19 = scmp.ge.s32.totalorder %s18, 4
      %s28 = sphi 0, %s30
      %s31 = sphi 0, %s28
      %s32 = sphi 0, %s31
      %s48 = sphi 0, %s32
      %s52 = sphi 0, %s52
      %s54 = sphi 0, %s52
      %s55 = sphi 0, %s54
      %s69 = sphi 0, %s55
      %s73 = sphi 0, %s73
      %s75 = sphi 0, %s73
      %s76 = sphi 0, %s75
      %s90 = sphi 0, %s76
      %s94 = sphi 0, %s94
      %s96 = sphi 0, %s94
      %s97 = sphi 0, %s96
      %s111 = sphi 0, %s97
      %s115 = sphi 0, %s115
      %s117 = sphi 0, %s115
      %s118 = sphi 0, %s117
      %s132 = sphi 0, %s118
      %s138 = sphi 0, %s140
      %s141 = sphi 0, %s138
      %s142 = sphi 0, %s141
      %s158 = sphi 0, %s142
    $region4: #{prenorm.1} parent=1 // loop_header_branch
      %21 = sbr.rel (%p19) target = $region8
    $region5: #{prenorm.1} parent=1 // loop_body
      %s23 = ssub.s32 %s18, 1
      %s24 = ssub.s32 %s18, 2
      %s25 = sadd.s32 %s18, 1
      %s26 = ssub.s32 %s18, %s25
      %p27 = scmp.eq.s32.totalorder %s26, 0
      %s29 = sadd.s32 %s28, 1
      %s30 = scalar_select %p27, %s28, %s29
      %p33 = pneg %p27
      %p34 = scmp.eq.s32.totalorder %s18, 1
      %p35 = por %p33, %p34
      %p36 = scmp.ne.s32.totalorder %s28, %s31
      %p37 = scmp.eq.s32.totalorder %s18, 0
      %p38 = por %p36, %p37
      %p39 = scmp.ne.s32.totalorder %s28, %s31
      %p40 = scmp.eq.s32.totalorder %s23, 1
      %p41 = por %p39, %p40
      %p42 = scmp.ne.s32.totalorder %s31, %s32
      %p43 = scmp.eq.s32.totalorder %s23, 0
      %p44 = por %p42, %p43
      %p45 = scmp.ne.s32.totalorder %s31, %s32
      %p46 = scmp.eq.s32.totalorder %s24, 1
      %p47 = por %p45, %p46
      %p49 = scmp.ne.s32.totalorder %s32, %s48
      %p50 = scmp.eq.s32.totalorder %s24, 0
      %p51 = por %p49, %p50
      %s53 = sadd.s32 %s52, 1
      %p56 = scmp.eq.s32.totalorder %s18, 1
      %p57 = scmp.ne.s32.totalorder %s52, %s54
      %p58 = scmp.eq.s32.totalorder %s18, 0
      %p59 = por %p57, %p58
      %p60 = scmp.ne.s32.totalorder %s52, %s54
      %p61 = scmp.eq.s32.totalorder %s23, 1
      %p62 = por %p60, %p61
      %p63 = scmp.ne.s32.totalorder %s54, %s55
      %p64 = scmp.eq.s32.totalorder %s23, 0
      %p65 = por %p63, %p64
      %p66 = scmp.ne.s32.totalorder %s54, %s55
      %p67 = scmp.eq.s32.totalorder %s24, 1
      %p68 = por %p66, %p67
      %p70 = scmp.ne.s32.totalorder %s55, %s69
      %p71 = scmp.eq.s32.totalorder %s24, 0
      %p72 = por %p70, %p71
      %s74 = sadd.s32 %s73, 1
      %p77 = scmp.eq.s32.totalorder %s18, 1
      %p78 = scmp.ne.s32.totalorder %s73, %s75
      %p79 = scmp.eq.s32.totalorder %s18, 0
      %p80 = por %p78, %p79
      %p81 = scmp.ne.s32.totalorder %s73, %s75
      %p82 = scmp.eq.s32.totalorder %s23, 1
      %p83 = por %p81, %p82
      %p84 = scmp.ne.s32.totalorder %s75, %s76
      %p85 = scmp.eq.s32.totalorder %s23, 0
      %p86 = por %p84, %p85
      %p87 = scmp.ne.s32.totalorder %s75, %s76
      %p88 = scmp.eq.s32.totalorder %s24, 1
      %p89 = por %p87, %p88
      %p91 = scmp.ne.s32.totalorder %s76, %s90
      %p92 = scmp.eq.s32.totalorder %s24, 0
      %p93 = por %p91, %p92
      %s95 = sadd.s32 %s94, 1
      %p98 = scmp.eq.s32.totalorder %s18, 1
      %p99 = scmp.ne.s32.totalorder %s94, %s96
      %p100 = scmp.eq.s32.totalorder %s18, 0
      %p101 = por %p99, %p100
      %p102 = scmp.ne.s32.totalorder %s94, %s96
      %p103 = scmp.eq.s32.totalorder %s23, 1
      %p104 = por %p102, %p103
      %p105 = scmp.ne.s32.totalorder %s96, %s97
      %p106 = scmp.eq.s32.totalorder %s23, 0
      %p107 = por %p105, %p106
      %p108 = scmp.ne.s32.totalorder %s96, %s97
      %p109 = scmp.eq.s32.totalorder %s24, 1
      %p110 = por %p108, %p109
      %p112 = scmp.ne.s32.totalorder %s97, %s111
      %p113 = scmp.eq.s32.totalorder %s24, 0
      %p114 = por %p112, %p113
      %s116 = sadd.s32 %s115, 1
      %p119 = scmp.eq.s32.totalorder %s18, 1
      %p120 = scmp.ne.s32.totalorder %s115, %s117
      %p121 = scmp.eq.s32.totalorder %s18, 0
      %p122 = por %p120, %p121
      %p123 = scmp.ne.s32.totalorder %s115, %s117
      %p124 = scmp.eq.s32.totalorder %s23, 1
      %p125 = por %p123, %p124
      %p126 = scmp.ne.s32.totalorder %s117, %s118
      %p127 = scmp.eq.s32.totalorder %s23, 0
      %p128 = por %p126, %p127
      %p129 = scmp.ne.s32.totalorder %s117, %s118
      %p130 = scmp.eq.s32.totalorder %s24, 1
      %p131 = por %p129, %p130
      %p133 = scmp.ne.s32.totalorder %s118, %s132
      %p134 = scmp.eq.s32.totalorder %s24, 0
      %p135 = por %p133, %p134
      %s136 = ssub.s32 %s18, %s25
      %p137 = scmp.eq.s32.totalorder %s136, 0
      %s139 = sadd.s32 %s138, 1
      %s140 = scalar_select %p137, %s138, %s139
      %p143 = pneg %p137
      %p144 = scmp.eq.s32.totalorder %s18, 1
      %p145 = por %p143, %p144
      %p146 = scmp.ne.s32.totalorder %s138, %s141
      %p147 = scmp.eq.s32.totalorder %s18, 0
      %p148 = por %p146, %p147
      %p149 = scmp.ne.s32.totalorder %s138, %s141
      %p150 = scmp.eq.s32.totalorder %s23, 1
      %p151 = por %p149, %p150
      %p152 = scmp.ne.s32.totalorder %s141, %s142
      %p153 = scmp.eq.s32.totalorder %s23, 0
      %p154 = por %p152, %p153
      %p155 = scmp.ne.s32.totalorder %s141, %s142
      %p156 = scmp.eq.s32.totalorder %s24, 1
      %p157 = por %p155, %p156
      %p159 = scmp.ne.s32.totalorder %s142, %s158
      %p160 = scmp.eq.s32.totalorder %s24, 0
      %p161 = por %p159, %p160
      %p162 = scmp.le.s32.totalorder 1, %s18
      %p163 = scmp.lt.s32.totalorder %s18, 3
      %p164 = pnand %p162, %p163
      %p165 = pneg %p164
      // Predicated region
      $region9: #{prenorm.1} parent=5 // pred_check
        _
      $region10: #{prenorm.1} parent=5 // pred_check_branch
        %167 = sbr.rel (%p164) target = $region12
      $region11: #{prenorm.1} parent=5 // pred_region
        %s168 = ssub.s32 %s18, 1
        // Predicated region
        $region13: #{prenorm.1} parent=11 // pred_check
          %p169 = pneg %p65
        $region14: #{prenorm.1} parent=11 // pred_check_branch
          %171 = sbr.rel (%p169) target = $region16
        $region15: #{prenorm.1} parent=11 // pred_region
          _
        $region16: #{prenorm.1} parent=11 // pred_fallthru
          _
        // Predicated region
        $region17: #{prenorm.1} parent=11 // pred_check
          %p172 = pneg %p86
        $region18: #{prenorm.1} parent=11 // pred_check_branch
          %174 = sbr.rel (%p172) target = $region20
        $region19: #{prenorm.1} parent=11 // pred_region
          _
        $region20: #{prenorm.1} parent=11 // pred_fallthru
          _
        // Predicated region
        $region21: #{prenorm.1} parent=11 // pred_check
          %p175 = pneg %p107
        $region22: #{prenorm.1} parent=11 // pred_check_branch
          %177 = sbr.rel (%p175) target = $region24
        $region23: #{prenorm.1} parent=11 // pred_region
          %s179 = ssub.s32 512, 512
          %180 = vsyncadd [#allocation6], %s179
          %s181 = sshll.u32 [#allocation5], 4
          %s182 = int_to_ptr.vmem [resolvable:$true] %s181
          %187 = dma.hbm_to_vmem [thread:$0]  %s3, 512, %s182, [#allocation6], 128, 128, 8
        $region24: #{prenorm.1} parent=11 // pred_fallthru
          _
        // Predicated region
        $region25: #{prenorm.1} parent=11 // pred_check
          %p188 = pneg %p128
        $region26: #{prenorm.1} parent=11 // pred_check_branch
          %190 = sbr.rel (%p188) target = $region28
        $region27: #{prenorm.1} parent=11 // pred_region
          _
        $region28: #{prenorm.1} parent=11 // pred_fallthru
          _
      $region12: #{prenorm.1} parent=5 // pred_fallthru
        _
      %p191 = scmp.lt.s32.totalorder %s18, 2
      // Predicated region
      $region29: #{prenorm.1} parent=5 // pred_check
        %p192 = pneg %p191
      $region30: #{prenorm.1} parent=5 // pred_check_branch
        %194 = sbr.rel (%p192) target = $region32
      $region31: #{prenorm.1} parent=5 // pred_region
        // Predicated region
        $region33: #{prenorm.1} parent=31 // pred_check
          %p195 = pneg %p38
        $region34: #{prenorm.1} parent=31 // pred_check_branch
          %197 = sbr.rel (%p195) target = $region36
        $region35: #{prenorm.1} parent=31 // pred_region
          %s198 = sand.u32 %s28, 1
          %s199 = scalar_lea.sflag [#allocation3], %s198
          %s200 = sand.u32 %s28, 1
          %s201 = smul.addr %s200, 8
          %s202 = scalar_lea.vmem [#allocation2], %s201
          %s204 = ssub.s32 128, 128
          %205 = vsyncadd %s199, %s204
          %s206 = smul.addr %s18, 128
          %s207 = scalar_lea.hbm %s0, %s206
          %s209 = sshll.u32 %s202, 4
          %s210 = int_to_ptr.vmem [resolvable:$true] %s209
          %212 = dma.hbm_to_vmem [thread:$0]  %s207, 128, %s210, %s199
        $region36: #{prenorm.1} parent=31 // pred_fallthru
          _
      $region32: #{prenorm.1} parent=5 // pred_fallthru
        _
      %p213 = scmp.le.s32.totalorder 1, %s18
      %p214 = scmp.lt.s32.totalorder %s18, 3
      %p215 = pnand %p213, %p214
      %p216 = pneg %p215
      // Predicated region
      $region37: #{prenorm.1} parent=5 // pred_check
        _
      $region38: #{prenorm.1} parent=5 // pred_check_branch
        %218 = sbr.rel (%p215) target = $region40
      $region39: #{prenorm.1} parent=5 // pred_region
        %s219 = ssub.s32 %s18, 1
        %s220 = sand.u32 %s31, 1
        %s221 = scalar_lea.sflag [#allocation3], %s220
        %s222 = sand.u32 %s31, 1
        %s223 = smul.addr %s222, 8
        %s224 = scalar_lea.vmem [#allocation2], %s223
        // Predicated region
        $region41: #{prenorm.1} parent=39 // pred_check
          %p225 = pneg %p44
        $region42: #{prenorm.1} parent=39 // pred_check_branch
          %227 = sbr.rel (%p225) target = $region44
        $region43: #{prenorm.1} parent=39 // pred_region
          %228 = dma.done %s221, 128
        $region44: #{prenorm.1} parent=39 // pred_fallthru
          _
        // Predicated region
        $region45: #{prenorm.1} parent=39 // pred_check
          %p229 = pneg %p107
        $region46: #{prenorm.1} parent=39 // pred_check_branch
          %231 = sbr.rel (%p229) target = $region48
        $region47: #{prenorm.1} parent=39 // pred_region
          %232 = dma.done [#allocation6], 512
        $region48: #{prenorm.1} parent=39 // pred_fallthru
          _
        %s233 = sand.u32 %s31, 1
        %s234 = scalar_lea.sflag [#allocation3], %s233
        %s235 = sand.u32 %s31, 1
        %s236 = smul.addr %s235, 8
        %s237 = scalar_lea.vmem [#allocation2], %s236
        %p238 = pneg %p44
        %p239 = pneg %p41
        %p240 = pneg %p65
        %p241 = pneg %p62
        %p242 = pneg %p86
        %p243 = pneg %p83
        %p244 = pneg %p107
        %p245 = pneg %p104
        %p246 = pneg %p128
        %p247 = pneg %p125
        %p248 = pneg %p154
        %p249 = pneg %p151
        %s250 = sand.u32 %s141, 1
        %s251 = scalar_lea.sflag [#allocation4], %s250
        %s252 = sand.u32 %s141, 1
        %s253 = smul.addr %s252, 8
        %s254 = scalar_lea.vmem [#allocation7], %s253
        %v255 = vld [vmem:[%s224] sm:$0xff]
        %vm256 = vcmask 261120
        %v257 = vsel %vm256, %v255, 0.0
        %258 = vadd.xlane.f32.xlu0 %v257
        %v259 = vpop.xlane.xlu0 %258
        %v260 = vmul.f32 %v259, 0.03125
        %v261 = vsub.f32 %v255, %v260
        %v262 = vmul.f32 %v261, %v261
        %v263 = vsel %vm256, %v262, 0.0
        %264 = vadd.xlane.f32.xlu0 %v263
        %v265 = vpop.xlane.xlu0 %264
        %v266 = vmul.f32 %v265, 0.03125
        %v267 = vadd.f32 %v266, 1e-05
        %v268 = vrsqrt.pop %v267
        %v269 = vmul.f32 %v261, %v268
        %v270 = vld [vmem:[%s1] sm:$0x1]
        %v272 = vlaneseq
        %v273 = vshrl.u32 %v272, 7
        %v274 = vsub.s32 0, %v273
        %v275 = vrot.slane %v270, %v274
        %v277 = vmul.f32 %v269, %v275
        %v278 = vld [vmem:[%s2] sm:$0x1]
        %v280 = vlaneseq
        %v281 = vshrl.u32 %v280, 7
        %v282 = vsub.s32 0, %v281
        %v283 = vrot.slane %v278, %v282
        %v285 = vadd.f32 %v277, %v283
        %v286 = vld [vmem:[#allocation5] sm:$0xff]
        %v287 = vld [vmem:[#allocation5 + $0x8] sm:$0xff]
        %v288 = vld [vmem:[#allocation5 + $0x10] sm:$0xff]
        %v289 = vld [vmem:[#allocation5 + $0x18] sm:$0xff]
        %v290 = vld [vmem:[%s4] sm:$0x1]
        %v292 = vlaneseq
        %v293 = vshrl.u32 %v292, 7
        %v294 = vsub.s32 0, %v293
        %v295 = vrot.slane %v290, %v294
        %v298 = vsel %vm256, %v285, 0
        %300 = vmatprep.subr.mxu0 0.0
        %301 = vmatpush1.msra.mxu0 %v286
        %302 = vmatprep.subr.mxu0 0.0
        %303 = vmatpush1.msra.mxu0 %v287
        %304 = vmatprep.subr.mxu0 0.0
        %305 = vmatpush1.msra.mxu0 %v288
        %306 = vmatprep.subr.mxu0 0.0
        %307 = vmatpush1.msra.mxu0 %v289
        %308 = vmatprep.subr.mxu0 0.0
        %309 = vmatpush1.msra.mxu0 0.0
        %310 = vmatprep.subr.mxu0 0.0
        %311 = vmatpush1.msra.mxu0 0.0
        %312 = vmatprep.subr.mxu0 0.0
        %313 = vmatpush1.msra.mxu0 0.0
        %314 = vmatprep.subr.mxu0 0.0
        %315 = vmatpush1.msra.mxu0 0.0
        %316 = vmatprep.subr.mxu0 0.0
        %317 = vmatpush1.msra.mxu0 0.0
        %318 = vmatprep.subr.mxu0 0.0
        %319 = vmatpush1.msra.mxu0 0.0
        %320 = vmatprep.subr.mxu0 0.0
        %321 = vmatpush1.msra.mxu0 0.0
        %322 = vmatprep.subr.mxu0 0.0
        %323 = vmatpush1.msra.mxu0 0.0
        %324 = vmatprep.subr.mxu0 0.0
        %325 = vmatpush1.msra.mxu0 0.0
        %326 = vmatprep.subr.mxu0 0.0
        %327 = vmatpush1.msra.mxu0 0.0
        %328 = vmatprep.subr.mxu0 0.0
        %329 = vmatpush1.msra.mxu0 0.0
        %330 = vmatprep.subr.mxu0 0.0
        %331 = vmatpush1.msra.mxu0 0.0
        %332 = vmatprep.subr.mxu0 0.0
        %333 = vmatpush1.msra.mxu0 0.0
        %334 = vmatprep.subr.mxu0 0.0
        %335 = vmatpush1.msra.mxu0 0.0
        %336 = vmatprep.subr.mxu0 0.0
        %337 = vmatpush1.msra.mxu0 0.0
        %338 = vmatprep.subr.mxu0 0.0
        %339 = vmatpush1.msra.mxu0 0.0
        %340 = vmatprep.subr.mxu0 0.0
        %341 = vmatpush1.msra.mxu0 0.0
        %342 = vmatprep.subr.mxu0 0.0
        %343 = vmatpush1.msra.mxu0 0.0
        %344 = vmatprep.subr.mxu0 0.0
        %345 = vmatpush1.msra.mxu0 0.0
        %346 = vmatprep.subr.mxu0 0.0
        %347 = vmatpush1.msra.mxu0 0.0
        %348 = vmatprep.subr.mxu0 0.0
        %349 = vmatpush1.msra.mxu0 0.0
        %350 = vmatprep.subr.mxu0 0.0
        %351 = vmatpush1.msra.mxu0 0.0
        %352 = vmatprep.subr.mxu0 0.0
        %353 = vmatpush1.msra.mxu0 0.0
        %354 = vmatprep.subr.mxu0 0.0
        %355 = vmatpush1.msra.mxu0 0.0
        %356 = vmatprep.subr.mxu0 0.0
        %357 = vmatpush1.msra.mxu0 0.0
        %358 = vmatprep.subr.mxu0 0.0
        %359 = vmatpush1.msra.mxu0 0.0
        %360 = vmatprep.subr.mxu0 0.0
        %361 = vmatpush1.msra.mxu0 0.0
        %362 = vmatprep.subr.mxu0 0.0
        %363 = vmatpush1.msra.mxu0 0.0
        %364 = vmatprep.mubr.f32.mxu0 0.0
        %365 = vmatmul.mubr.f32.gmra.mrb[0].mxu0 %v298
        %v366 = vpop.f32.mrb[0].mxu0
        %v367 = vadd.f32 %v295, %v366
        %v368 = vpop.f32.mrb[0].mxu0
        %369 = vdwg.mxu0
        %370 = vst.msk [vmem:[%s254] sm:$0xff] %vm256, %v367
        %s371 = sand.u32 %s141, 1
        %s372 = scalar_lea.sflag [#allocation4], %s371
        %s373 = sand.u32 %s141, 1
        %s374 = smul.addr %s373, 8
        %s375 = scalar_lea.vmem [#allocation7], %s374
        // Predicated region
        $region49: #{prenorm.1} parent=39 // pred_check
          %p376 = pneg %p151
        $region50: #{prenorm.1} parent=39 // pred_check_branch
          %378 = sbr.rel (%p376) target = $region52
        $region51: #{prenorm.1} parent=39 // pred_region
          %s380 = ssub.s32 128, 128
          %381 = vsyncadd %s372, %s380
          %s382 = smul.addr %s23, 128
          %s383 = scalar_lea.hbm %s5, %s382
          %s385 = sshll.u32 %s375, 4
          %s386 = int_to_ptr.vmem [resolvable:$true] %s385
          %388 = dma.vmem_to_hbm [thread:$0]  %s386, 128, %s383, %s372
        $region52: #{prenorm.1} parent=39 // pred_fallthru
          _
      $region40: #{prenorm.1} parent=5 // pred_fallthru
        _
      %p389 = scmp.le.s32.totalorder 2, %s18
      // Predicated region
      $region53: #{prenorm.1} parent=5 // pred_check
        %p390 = pneg %p389
      $region54: #{prenorm.1} parent=5 // pred_check_branch
        %392 = sbr.rel (%p390) target = $region56
      $region55: #{prenorm.1} parent=5 // pred_region
        %s393 = ssub.s32 %s18, 2
        // Predicated region
        $region57: #{prenorm.1} parent=55 // pred_check
          %p394 = pneg %p157
        $region58: #{prenorm.1} parent=55 // pred_check_branch
          %396 = sbr.rel (%p394) target = $region60
        $region59: #{prenorm.1} parent=55 // pred_region
          %s397 = sand.u32 %s142, 1
          %s398 = scalar_lea.sflag [#allocation4], %s397
          %s399 = sand.u32 %s142, 1
          %s400 = smul.addr %s399, 8
          %s401 = scalar_lea.vmem [#allocation7], %s400
          %402 = dma.done %s398, 128
        $region60: #{prenorm.1} parent=55 // pred_fallthru
          _
      $region56: #{prenorm.1} parent=5 // pred_fallthru
        _
    $region6: #{prenorm.1} parent=1 // loop_footer
      %s22 = sadd.s32 1, %s18
    $region7: #{prenorm.1} parent=1 // loop_footer_branch
      %17 = sbr.rel target = $region3
    $region8: #{prenorm.1} parent=1 // loop_exit
      _
    %403 = vsyncpa [#allocation3], 1
    %s404 = scalar_lea.sflag [#allocation3], 1
    %405 = vsyncpa %s404, 1
    %406 = vsyncpa [#allocation6], 1
    %407 = vsyncpa [#allocation4], 1
    %s408 = scalar_lea.sflag [#allocation4], 1
    %409 = vsyncpa %s408, 1

</llo_original>
